<compile_context>
chip_gen: v6e
topology: v6e:2x2x1
jax: 0.10.0
libtpu: 0.0.40
codegen_flags: <defaults>
</compile_context>

<pallas_src>
import functools
from math import sqrt

import jax
import jax.numpy as jnp
from jax import lax
from jax.experimental import pallas as pl
from jax.experimental.pallas import tpu as pltpu


_VMEM_LIMIT_BYTES = 48 * 1024 * 1024        # fits v7x (64 MiB) with headroom
_SOFTMAX_APPROX_RECIPROCAL = True           # EUP vrcp; set False for exact div
_CFG = {"single_buffer_consts": True}       # pl.Buffered(1) on constant K/V


def _round_up(x, m):
    return (x + m - 1) // m * m


# ----------------------------------------------------------------------------
# Tiled Linear:  y = x @ W_t + b     (W_t already stored as (in, out))
# ----------------------------------------------------------------------------
def _linear_kernel(x_ref, w_ref, b_ref, o_ref, acc_ref):
    @pl.when(pl.program_id(2) == 0)
    def _():
        acc_ref[...] = jnp.zeros_like(acc_ref)

    # Natural (M,K)x(K,N) MXU contraction, bf16 operands, f32 accumulation.
    acc_ref[...] += lax.dot_general(
        x_ref[...], w_ref[...],
        dimension_numbers=(((1,), (0,)), ((), ())),
        preferred_element_type=jnp.float32)

    @pl.when(pl.program_id(2) == pl.num_programs(2) - 1)
    def _():
        o_ref[...] = (acc_ref[...] + b_ref[...]).astype(o_ref.dtype)


def pallas_linear(x2d, w_t, b, *, tm=512, tn=512, tk=1024,
                  compute_dtype=jnp.bfloat16, out_dtype=None):
    """x2d: (N, in), w_t: (in, out) pre-transposed, b: (out,) -> (N, out)."""
    n, k_in = x2d.shape
    k_w, out_f = w_t.shape
    assert k_w == k_in
    out_dtype = out_dtype or x2d.dtype

    # Bounded tile plan + zero padding (exact for matmul); no full-dim
    # fallback for large awkward dims.
    bm = tm if n > tm else _round_up(n, 8)
    bn = tn if out_f > tn else out_f
    bk = tk if k_in > tk else k_in
    n_p, o_p, k_p = _round_up(n, bm), _round_up(out_f, bn), _round_up(k_in, bk)

    x_p = x2d if (n_p == n and k_p == k_in) else jnp.pad(
        x2d, ((0, n_p - n), (0, k_p - k_in)))
    w_p = w_t if (k_p == k_in and o_p == out_f) else jnp.pad(
        w_t, ((0, k_p - k_in), (0, o_p - out_f)))
    b_p = b if o_p == out_f else jnp.pad(b, (0, o_p - out_f))

    x_p = x_p.astype(compute_dtype)
    w_p = w_p.astype(compute_dtype)
    b2 = b_p.reshape(1, o_p).astype(jnp.float32)

    out = pl.pallas_call(
        _linear_kernel,
        out_shape=jax.ShapeDtypeStruct((n_p, o_p), out_dtype),
        grid_spec=pltpu.PrefetchScalarGridSpec(
            num_scalar_prefetch=0,
            grid=(n_p // bm, o_p // bn, k_p // bk),
            in_specs=[
                pl.BlockSpec((bm, bk), lambda i, j, k: (i, k)),
                pl.BlockSpec((bk, bn), lambda i, j, k: (k, j)),
                pl.BlockSpec((1, bn), lambda i, j, k: (0, j)),
            ],
            out_specs=pl.BlockSpec((bm, bn), lambda i, j, k: (i, j)),
            scratch_shapes=[pltpu.VMEM((bm, bn), jnp.float32)],
        ),
        compiler_params=pltpu.CompilerParams(
            dimension_semantics=("parallel", "parallel", "arbitrary"),
            vmem_limit_bytes=_VMEM_LIMIT_BYTES,
        ),
    )(x_p, w_p, b2)

    if (n_p, o_p) != (n, out_f):
        out = out[:n, :out_f]
    return out


# ----------------------------------------------------------------------------
# Fused kernel:  Q projection + multi-head cross attention + output projection
#   x: (tm, d_model) row tile of the target embedding
#   K/V: (S, H*E) resident (constant block index, optionally single-buffered)
#   out: (tm, d_llm) single lane-dense store per grid step
# ----------------------------------------------------------------------------
def _fused_attn_kernel(n_heads, head_dim, scale,
                       x_ref, wq_ref, bq_ref, k_ref, v_ref, wo_ref, bo_ref,
                       o_ref):
    # --- fused Q projection on the MXU: (tm, d_model) @ (d_model, H*E) ---
    q = lax.dot_general(x_ref[...], wq_ref[...],
                        dimension_numbers=(((1,), (0,)), ((), ())),
                        preferred_element_type=jnp.float32)
    # bias + 1/sqrt(E) applied ONCE on (tm, H*E), then bf16 feed for scores.
    q = ((q + bq_ref[...]) * scale).astype(k_ref.dtype)

    k_all = k_ref[...]            # (S, H*E)
    v_all = v_ref[...]            # (S, H*E)

    head_outs = []
    for h in range(n_heads):      # static head loop, traced once
        lo = h * head_dim
        hi = lo + head_dim
        q_h = q[:, lo:hi]         # (tm, E)
        k_h = k_all[:, lo:hi]     # (S,  E)
        v_h = v_all[:, lo:hi]     # (S,  E)

        # scores[m, s] = sum_e q[m, e] k[s, e]  (contract last axes, f32 acc)
        scores = lax.dot_general(q_h, k_h,
                                 dimension_numbers=(((1,), (1,)), ((), ())),
                                 preferred_element_type=jnp.float32)  # (tm, S)
        m = scores.max(axis=-1, keepdims=True)
        p = jnp.exp(scores - m)
        denom = p.sum(axis=-1, keepdims=True)
        if _SOFTMAX_APPROX_RECIPROCAL:
            attn = p * pl.reciprocal(denom, approx=True)   # EUP slot
        else:
            attn = p / denom

        head_outs.append(lax.dot_general(attn.astype(v_h.dtype), v_h,
                                         dimension_numbers=(((1,), (0,)), ((), ())),
                                         preferred_element_type=jnp.float32))

    # One lane-dense (tm, H*E) value — no VMEM scratch, no per-head masked
    # stores — feeding the fused output projection directly.
    ctx = jnp.concatenate(head_outs, axis=-1).astype(wo_ref.dtype)

    # --- fused output projection: (tm, H*E) @ (H*E, d_llm) ---
    out = lax.dot_general(ctx, wo_ref[...],
                          dimension_numbers=(((1,), (0,)), ((), ())),
                          preferred_element_type=jnp.float32)
    o_ref[...] = (out + bo_ref[...]).astype(o_ref.dtype)


def pallas_fused_attention(x_rows, wq_t, bq, k, v, wo_t, bo, n_heads, scale,
                           *, tm=256, compute_dtype=jnp.bfloat16,
                           out_dtype=jnp.float32):
    m_rows, d_model = x_rows.shape
    s, he = k.shape
    d_llm = wo_t.shape[1]
    assert wq_t.shape == (d_model, he)
    assert wo_t.shape[0] == he
    assert he % n_heads == 0, "projection width must equal n_heads * head_dim"
    head_dim = he // n_heads

    bm = tm if m_rows > tm else _round_up(m_rows, 8)
    m_p = _round_up(m_rows, bm)

    # VMEM residency guard: K/V + weights are kept resident in this kernel.
    itemsize = jnp.dtype(compute_dtype).itemsize
    bufs = 1 if _CFG["single_buffer_consts"] else 2
    resident = bufs * itemsize * (2 * s * he) \
        + 2 * itemsize * (d_model * he + he * d_llm)
    per_tile = 2 * itemsize * bm * d_model + 2 * 4 * bm * d_llm \
        + 4 * bm * (2 * he + 2 * s)
    if resident + per_tile > int(0.8 * _VMEM_LIMIT_BYTES):
        # TODO(synk): flash-style S-tiling with online softmax for large S.
        raise NotImplementedError(
            "Resident K/V + weights exceed the VMEM budget for this shape; "
            "flash-style S-tiling is required (see TODO).")

    x_p = x_rows if m_p == m_rows else jnp.pad(
        x_rows, ((0, m_p - m_rows), (0, 0)))
    x_p = x_p.astype(compute_dtype)
    wq_c = wq_t.astype(compute_dtype)
    wo_c = wo_t.astype(compute_dtype)
    k_c = k.astype(compute_dtype)
    v_c = v.astype(compute_dtype)
    bq2 = bq.reshape(1, he).astype(jnp.float32)
    bo2 = bo.reshape(1, d_llm).astype(jnp.float32)

    def _const_spec(shape, single_buffer):
        # Constant block index -> DMA'd once and reused every grid step.
        # Single-buffer it so it is not needlessly double-buffered (v7x VMEM).
        if single_buffer:
            return pl.BlockSpec(shape, lambda i: (0, 0),
                                pipeline_mode=pl.Buffered(1))
        return pl.BlockSpec(shape, lambda i: (0, 0))

    sb = _CFG["single_buffer_consts"]
    kernel = functools.partial(_fused_attn_kernel, n_heads, head_dim, scale)
    out = pl.pallas_call(
        kernel,
        out_shape=jax.ShapeDtypeStruct((m_p, d_llm), out_dtype),
        grid_spec=pltpu.PrefetchScalarGridSpec(
            num_scalar_prefetch=0,
            grid=(m_p // bm,),
            in_specs=[
                pl.BlockSpec((bm, d_model), lambda i: (i, 0)),   # x row tile
                pl.BlockSpec((d_model, he), lambda i: (0, 0)),   # WqT (resident)
                pl.BlockSpec((1, he), lambda i: (0, 0)),         # bq
                _const_spec((s, he), sb),                        # K  (resident)
                _const_spec((s, he), sb),                        # V  (resident)
                pl.BlockSpec((he, d_llm), lambda i: (0, 0)),     # WoT (resident)
                pl.BlockSpec((1, d_llm), lambda i: (0, 0)),      # bo
            ],
            out_specs=pl.BlockSpec((bm, d_llm), lambda i: (i, 0)),
        ),
        compiler_params=pltpu.CompilerParams(
            dimension_semantics=("parallel",),
            vmem_limit_bytes=_VMEM_LIMIT_BYTES,
        ),
    )(x_p, wq_c, bq2, k_c, v_c, wo_c, bo2)

    return out[:m_rows] if m_p != m_rows else out


# ----------------------------------------------------------------------------
# Forward: K/V projections (tiled linears) + fused Qproj/attention/out-proj
# ----------------------------------------------------------------------------
def reprogramming_layer_forward(prepared, target_embedding, source_embedding,
                                value_embedding, n_heads,
                                compute_dtype=jnp.bfloat16):
    B, L, d_model = target_embedding.shape
    x = target_embedding.reshape(B * L, d_model)

    # K / V projections are shared by every Q row tile -> separate tiled
    # kernels; their outputs stay in the bf16 compute dtype (half HBM traffic).
    k = pallas_linear(source_embedding, prepared["wk_t"], prepared["bk"],
                      compute_dtype=compute_dtype, out_dtype=compute_dtype)
    v = pallas_linear(value_embedding, prepared["wv_t"], prepared["bv"],
                      compute_dtype=compute_dtype, out_dtype=compute_dtype)

    he = prepared["wq_t"].shape[1]
    head_dim = he // n_heads
    out = pallas_fused_attention(x, prepared["wq_t"], prepared["bq"], k, v,
                                 prepared["wo_t"], prepared["bo"],
                                 n_heads, 1.0 / sqrt(head_dim),
                                 compute_dtype=compute_dtype,
                                 out_dtype=target_embedding.dtype)
    return out.reshape(B, L, -1)


def init_params(key, d_model, n_heads, d_llm, d_keys=None, dtype=jnp.float32):
    d_keys = d_keys or d_model // n_heads
    dk = d_keys * n_heads
    keys = jax.random.split(key, 8)

    def lin(kw, kb, out_f, in_f):
        bound = 1.0 / sqrt(in_f)
        w = jax.random.uniform(kw, (out_f, in_f), dtype, -bound, bound)
        b = jax.random.uniform(kb, (out_f,), dtype, -bound, bound)
        return w, b

    wq, bq = lin(keys[0], keys[1], dk, d_model)
    wk, bk = lin(keys[2], keys[3], dk, d_llm)
    wv, bv = lin(keys[4], keys[5], dk, d_llm)
    wo, bo = lin(keys[6], keys[7], d_llm, dk)
    return dict(wq=wq, bq=bq, wk=wk, bk=bk, wv=wv, bv=bv, wo=wo, bo=bo)


def prepare_params(params):
    """One-time layout prep: weights stored as (in, out) so every kernel
    matmul is a natural (M,K)x(K,N) contraction (no in-kernel transposes)."""
    return dict(
        wq_t=params["wq"].T, bq=params["bq"],
        wk_t=params["wk"].T, bk=params["bk"],
        wv_t=params["wv"].T, bv=params["bv"],
        wo_t=params["wo"].T, bo=params["bo"],
    )


# ----------------------------------------------------------------------------
# Pure-JAX f32 reference (mirrors the PyTorch forward, eval mode)
# ----------------------------------------------------------------------------
def reference_forward(params, tgt, src, val, n_heads):
    B, L, _ = tgt.shape
    H = n_heads
    q = (tgt @ params["wq"].T + params["bq"]).reshape(B, L, H, -1)
    k = (src @ params["wk"].T + params["bk"]).reshape(src.shape[0], H, -1)
    v = (val @ params["wv"].T + params["bv"]).reshape(val.shape[0], H, -1)
    E = q.shape[-1]
    scores = jnp.einsum("blhe,she->bhls", q, k)
    A = jax.nn.softmax(scores / sqrt(E), axis=-1)
    out = jnp.einsum("bhls,she->blhe", A, v).reshape(B, L, -1)
    return out @ params["wo"].T + params["bo"]


if __name__ == "__main__":
    B, L, S = 2, 8, 16
    d_model, n_heads, d_llm = 32, 4, 64

    key = jax.random.PRNGKey(0)
    kp, kt, ks, kv = jax.random.split(key, 4)
    params = init_params(kp, d_model, n_heads, d_llm)
    prepared = prepare_params(params)

    target_embedding = jax.random.normal(kt, (B, L, d_model), jnp.float32)
    source_embedding = jax.random.normal(ks, (S, d_llm), jnp.float32)
    value_embedding = jax.random.normal(kv, (S, d_llm), jnp.float32)

    def run():
        return reprogramming_layer_forward(prepared, target_embedding,
                                           source_embedding, value_embedding,
                                           n_heads)

    try:
        out = jax.block_until_ready(run())
    except Exception:
        # pipeline_mode=pl.Buffered(1) on the constant K/V blocks is a newer
        # perf knob; fall back to default double-buffering if it is rejected.
        _CFG["single_buffer_consts"] = False
        out = jax.block_until_ready(run())

    ref = reference_forward(params, target_embedding, source_embedding,
                            value_embedding, n_heads)
    assert out.shape == (B, L, d_llm)
    # tolerance covers bf16 MXU feeds + approx softmax reciprocal vs f32 ref
    max_err = float(jnp.max(jnp.abs(out - ref)))
    assert jnp.allclose(out, ref, atol=5e-2, rtol=5e-2), f"max abs err {max_err}"
    print("KERNEL_OK")
</pallas_src>

<mosaic_0001>
module attributes {stable_mosaic.version = 11 : i64} {
  func.func @_linear_kernel(%arg0: i32, %arg1: i32, %arg2: i32, %arg3: memref<16x64xbf16, #tpu.memory_space<vmem>>, %arg4: memref<64x32xbf16, #tpu.memory_space<vmem>>, %arg5: memref<1x32xf32, #tpu.memory_space<vmem>>, %arg6: memref<16x32xbf16, #tpu.memory_space<vmem>>, %arg7: memref<16x32xf32, #tpu.memory_space<vmem>>) attributes {dimension_semantics = [#tpu.dimension_semantics<parallel>, #tpu.dimension_semantics<parallel>, #tpu.dimension_semantics<arbitrary>], iteration_bounds = array<i64: 1, 1, 1>, scalar_prefetch = 0 : i64, scratch_operands = 1 : i64, tpu.core_type = #tpu.core_type<tc>, window_params = [{transform_indices = @transform_0, window_bounds = array<i64: 16, 64>}, {transform_indices = @transform_1, window_bounds = array<i64: 64, 32>}, {transform_indices = @transform_2, window_bounds = array<i64: 1, 32>}, {transform_indices = @transform_3, window_bounds = array<i64: 16, 32>}]} {
    %c0_i32 = arith.constant 0 : i32
    %0 = arith.cmpi eq, %arg2, %c0_i32 : i32
    %1 = arith.extui %0 : i1 to i32
    %c0_i32_0 = arith.constant 0 : i32
    %2 = arith.cmpi ne, %1, %c0_i32_0 : i32
    scf.if %2 {
      %cst_10 = arith.constant 0.000000e+00 : f32
      %12 = vector.broadcast %cst_10 : f32 to vector<16x32xf32>
      %c0_11 = arith.constant 0 : index
      %c0_12 = arith.constant 0 : index
      %13 = vector.load %arg7[%c0_11, %c0_12] : memref<16x32xf32, #tpu.memory_space<vmem>>, vector<16x32xf32>
      tpu.vector_store %arg7[%c0_11, %c0_12], %12 {strides = array<i32>} : memref<16x32xf32, #tpu.memory_space<vmem>>, vector<16x32xf32>,
    } else {
    }
    %c0 = arith.constant 0 : index
    %c0_1 = arith.constant 0 : index
    %3 = vector.load %arg7[%c0, %c0_1] : memref<16x32xf32, #tpu.memory_space<vmem>>, vector<16x32xf32>
    %c0_2 = arith.constant 0 : index
    %c0_3 = arith.constant 0 : index
    %4 = vector.load %arg3[%c0_2, %c0_3] : memref<16x64xbf16, #tpu.memory_space<vmem>>, vector<16x64xbf16>
    %c0_4 = arith.constant 0 : index
    %c0_5 = arith.constant 0 : index
    %5 = vector.load %arg4[%c0_4, %c0_5] : memref<64x32xbf16, #tpu.memory_space<vmem>>, vector<64x32xbf16>
    %cst = arith.constant dense<0.000000e+00> : vector<16x32xf32>
    %6 = tpu.matmul %4, %5, %cst {dimension_numbers = #tpu.dot_dimension_numbers<[1], [0], [0], [1], [0, 0, 1, 1], [], []>} : vector<16x64xbf16>, vector<64x32xbf16>, vector<16x32xf32> -> vector<16x32xf32>
    %7 = arith.addf %3, %6 : vector<16x32xf32>
    %c0_6 = arith.constant 0 : index
    %c0_7 = arith.constant 0 : index
    %8 = vector.load %arg7[%c0_6, %c0_7] : memref<16x32xf32, #tpu.memory_space<vmem>>, vector<16x32xf32>
    tpu.vector_store %arg7[%c0_6, %c0_7], %7 {strides = array<i32>} : memref<16x32xf32, #tpu.memory_space<vmem>>, vector<16x32xf32>,
    %c0_i32_8 = arith.constant 0 : i32
    %9 = arith.cmpi eq, %arg2, %c0_i32_8 : i32
    %10 = arith.extui %9 : i1 to i32
    %c0_i32_9 = arith.constant 0 : i32
    %11 = arith.cmpi ne, %10, %c0_i32_9 : i32
    scf.if %11 {
      %c0_10 = arith.constant 0 : index
      %c0_11 = arith.constant 0 : index
      %12 = vector.load %arg7[%c0_10, %c0_11] : memref<16x32xf32, #tpu.memory_space<vmem>>, vector<16x32xf32>
      %c0_12 = arith.constant 0 : index
      %c0_13 = arith.constant 0 : index
      %13 = vector.load %arg5[%c0_12, %c0_13] : memref<1x32xf32, #tpu.memory_space<vmem>>, vector<1x32xf32>
      %14 = vector.broadcast %13 : vector<1x32xf32> to vector<16x32xf32>
      %15 = arith.addf %12, %14 : vector<16x32xf32>
      %16 = arith.truncf %15 : vector<16x32xf32> to vector<16x32xbf16>
      %c0_14 = arith.constant 0 : index
      %c0_15 = arith.constant 0 : index
      %17 = vector.load %arg6[%c0_14, %c0_15] : memref<16x32xbf16, #tpu.memory_space<vmem>>, vector<16x32xbf16>
      tpu.vector_store %arg6[%c0_14, %c0_15], %16 {strides = array<i32>} : memref<16x32xbf16, #tpu.memory_space<vmem>>, vector<16x32xbf16>,
    } else {
    }
    return
  }
  func.func @transform_0(%arg0: i32, %arg1: i32, %arg2: i32) -> (i32, i32) {
    %c0_i32 = arith.constant 0 : i32
    return %arg0, %arg2 : i32, i32
  }
  func.func @transform_1(%arg0: i32, %arg1: i32, %arg2: i32) -> (i32, i32) {
    %c0_i32 = arith.constant 0 : i32
    return %arg2, %arg1 : i32, i32
  }
  func.func @transform_2(%arg0: i32, %arg1: i32, %arg2: i32) -> (i32, i32) {
    %c0_i32 = arith.constant 0 : i32
    %c0_i32_0 = arith.constant 0 : i32
    return %c0_i32, %arg1 : i32, i32
  }
  func.func @transform_3(%arg0: i32, %arg1: i32, %arg2: i32) -> (i32, i32) {
    %c0_i32 = arith.constant 0 : i32
    return %arg0, %arg1 : i32, i32
  }
}

module attributes {stable_mosaic.version = 11 : i64} {
  func.func @_linear_kernel(%arg0: i32, %arg1: i32, %arg2: i32, %arg3: memref<16x64xbf16, #tpu.memory_space<vmem>>, %arg4: memref<64x32xbf16, #tpu.memory_space<vmem>>, %arg5: memref<1x32xf32, #tpu.memory_space<vmem>>, %arg6: memref<16x32xbf16, #tpu.memory_space<vmem>>, %arg7: memref<16x32xf32, #tpu.memory_space<vmem>>) attributes {dimension_semantics = [#tpu.dimension_semantics<parallel>, #tpu.dimension_semantics<parallel>, #tpu.dimension_semantics<arbitrary>], iteration_bounds = array<i64: 1, 1, 1>, scalar_prefetch = 0 : i64, scratch_operands = 1 : i64, tpu.core_type = #tpu.core_type<tc>, window_params = [{transform_indices = @transform_0, window_bounds = array<i64: 16, 64>}, {transform_indices = @transform_1, window_bounds = array<i64: 64, 32>}, {transform_indices = @transform_2, window_bounds = array<i64: 1, 32>}, {transform_indices = @transform_3, window_bounds = array<i64: 16, 32>}]} {
    %c0_i32 = arith.constant 0 : i32
    %0 = arith.cmpi eq, %arg2, %c0_i32 : i32
    %1 = arith.extui %0 : i1 to i32
    %c0_i32_0 = arith.constant 0 : i32
    %2 = arith.cmpi ne, %1, %c0_i32_0 : i32
    scf.if %2 {
      %cst_10 = arith.constant 0.000000e+00 : f32
      %12 = vector.broadcast %cst_10 : f32 to vector<16x32xf32>
      %c0_11 = arith.constant 0 : index
      %c0_12 = arith.constant 0 : index
      %13 = vector.load %arg7[%c0_11, %c0_12] : memref<16x32xf32, #tpu.memory_space<vmem>>, vector<16x32xf32>
      tpu.vector_store %arg7[%c0_11, %c0_12], %12 {strides = array<i32>} : memref<16x32xf32, #tpu.memory_space<vmem>>, vector<16x32xf32>,
    } else {
    }
    %c0 = arith.constant 0 : index
    %c0_1 = arith.constant 0 : index
    %3 = vector.load %arg7[%c0, %c0_1] : memref<16x32xf32, #tpu.memory_space<vmem>>, vector<16x32xf32>
    %c0_2 = arith.constant 0 : index
    %c0_3 = arith.constant 0 : index
    %4 = vector.load %arg3[%c0_2, %c0_3] : memref<16x64xbf16, #tpu.memory_space<vmem>>, vector<16x64xbf16>
    %c0_4 = arith.constant 0 : index
    %c0_5 = arith.constant 0 : index
    %5 = vector.load %arg4[%c0_4, %c0_5] : memref<64x32xbf16, #tpu.memory_space<vmem>>, vector<64x32xbf16>
    %cst = arith.constant dense<0.000000e+00> : vector<16x32xf32>
    %6 = tpu.matmul %4, %5, %cst {dimension_numbers = #tpu.dot_dimension_numbers<[1], [0], [0], [1], [0, 0, 1, 1], [], []>} : vector<16x64xbf16>, vector<64x32xbf16>, vector<16x32xf32> -> vector<16x32xf32>
    %7 = arith.addf %3, %6 : vector<16x32xf32>
    %c0_6 = arith.constant 0 : index
    %c0_7 = arith.constant 0 : index
    %8 = vector.load %arg7[%c0_6, %c0_7] : memref<16x32xf32, #tpu.memory_space<vmem>>, vector<16x32xf32>
    tpu.vector_store %arg7[%c0_6, %c0_7], %7 {strides = array<i32>} : memref<16x32xf32, #tpu.memory_space<vmem>>, vector<16x32xf32>,
    %c0_i32_8 = arith.constant 0 : i32
    %9 = arith.cmpi eq, %arg2, %c0_i32_8 : i32
    %10 = arith.extui %9 : i1 to i32
    %c0_i32_9 = arith.constant 0 : i32
    %11 = arith.cmpi ne, %10, %c0_i32_9 : i32
    scf.if %11 {
      %c0_10 = arith.constant 0 : index
      %c0_11 = arith.constant 0 : index
      %12 = vector.load %arg7[%c0_10, %c0_11] : memref<16x32xf32, #tpu.memory_space<vmem>>, vector<16x32xf32>
      %c0_12 = arith.constant 0 : index
      %c0_13 = arith.constant 0 : index
      %13 = vector.load %arg5[%c0_12, %c0_13] : memref<1x32xf32, #tpu.memory_space<vmem>>, vector<1x32xf32>
      %14 = vector.broadcast %13 : vector<1x32xf32> to vector<16x32xf32>
      %15 = arith.addf %12, %14 : vector<16x32xf32>
      %16 = arith.truncf %15 : vector<16x32xf32> to vector<16x32xbf16>
      %c0_14 = arith.constant 0 : index
      %c0_15 = arith.constant 0 : index
      %17 = vector.load %arg6[%c0_14, %c0_15] : memref<16x32xbf16, #tpu.memory_space<vmem>>, vector<16x32xbf16>
      tpu.vector_store %arg6[%c0_14, %c0_15], %16 {strides = array<i32>} : memref<16x32xbf16, #tpu.memory_space<vmem>>, vector<16x32xbf16>,
    } else {
    }
    return
  }
  func.func @transform_0(%arg0: i32, %arg1: i32, %arg2: i32) -> (i32, i32) {
    %c0_i32 = arith.constant 0 : i32
    return %arg0, %arg2 : i32, i32
  }
  func.func @transform_1(%arg0: i32, %arg1: i32, %arg2: i32) -> (i32, i32) {
    %c0_i32 = arith.constant 0 : i32
    return %arg2, %arg1 : i32, i32
  }
  func.func @transform_2(%arg0: i32, %arg1: i32, %arg2: i32) -> (i32, i32) {
    %c0_i32 = arith.constant 0 : i32
    %c0_i32_0 = arith.constant 0 : i32
    return %c0_i32, %arg1 : i32, i32
  }
  func.func @transform_3(%arg0: i32, %arg1: i32, %arg2: i32) -> (i32, i32) {
    %c0_i32 = arith.constant 0 : i32
    return %arg0, %arg1 : i32, i32
  }
}

</mosaic_0001>

<llo_original>
// kernel: tpu_custom_call.1
$region0: #{tpu_custom_call.1}
  #allocation0 [shape = 'u32[]', space=smem, size = 0x4, offset = 0x4, fixed_abs, tag = 'smem constant byte address 0x4 - core index']
  #allocation1 [shape = 'u32[144,128]{1,0:T(1,128)}', space=vmem, size = 0x12000, scoped, tag = 'internal scratch']
  #allocation2 [shape = 'f32[16,32]{1,0:T(8,128)}', space=vmem, size = 0x2000, scoped, tag = 'scratch operand']
  %s0 = inlined_call_operand.vmem [shape: bf16[16,64], index: 0, kind: input, shape index: {}]
  %s1 = inlined_call_operand.vmem [shape: bf16[64,32], index: 1, kind: input, shape index: {}]
  %s2 = inlined_call_operand.vmem [shape: f32[1,32], index: 2, kind: input, shape index: {}]
  %s3 = inlined_call_operand.hbm [shape: bf16[16,32], index: 3, kind: output, shape index: {}]
  %s4 = sld [smem:[#allocation0]]
  $region30: #{tpu_custom_call.1} parent=0
    _
  %s6 = ssub.s32 1, %s4
  %s7 = scalar_select 0, %s6, %s4
  $region1: #{tpu_custom_call.1} parent=0
    #allocation3 [shape = 'u8[4096]{0}', space=vmem, size = 0x1000, scoped, tag = 'output window, operand 0, single buffered']
    #allocation4 [shape = 's32[1]{0}', space=sflag, size = 0x4, scoped, tag = 'scoped memory for tpu_custom_call.1']
    %8 = vsyncpa [#allocation4], 0
    // Predicated region
    $region2: #{tpu_custom_call.1} parent=1 // pred_check
      _
    $region3: #{tpu_custom_call.1} parent=1 // pred_check_branch
      %10 = sbr.rel (0) target = $region5
    $region4: #{tpu_custom_call.1} parent=1 // pred_region
      _
    $region5: #{tpu_custom_call.1} parent=1 // pred_fallthru
      _
    // Predicated region
    $region6: #{tpu_custom_call.1} parent=1 // pred_check
      _
    $region7: #{tpu_custom_call.1} parent=1 // pred_check_branch
      %12 = sbr.rel (0) target = $region9
    $region8: #{tpu_custom_call.1} parent=1 // pred_region
      _
    $region9: #{tpu_custom_call.1} parent=1 // pred_fallthru
      _
    // Predicated region
    $region10: #{tpu_custom_call.1} parent=1 // pred_check
      _
    $region11: #{tpu_custom_call.1} parent=1 // pred_check_branch
      %14 = sbr.rel (0) target = $region13
    $region12: #{tpu_custom_call.1} parent=1 // pred_region
      _
    $region13: #{tpu_custom_call.1} parent=1 // pred_fallthru
      _
    %p16 = scmp.eq.s32.totalorder 0, 0
    // Predicated region
    $region14: #{tpu_custom_call.1} parent=1 // pred_check
      %p17 = pneg %p16
    $region15: #{tpu_custom_call.1} parent=1 // pred_check_branch
      %19 = sbr.rel (%p17) target = $region17
    $region16: #{tpu_custom_call.1} parent=1 // pred_region
      %vm20 = vcmask 261120
      %21 = vst.msk [vmem:[#allocation2] sm:$0xff] %vm20, 0.0
      %22 = vst.msk [vmem:[#allocation2 + $0x8] sm:$0xff] %vm20, 0.0
    $region17: #{tpu_custom_call.1} parent=1 // pred_fallthru
      _
    %v23 = vld [vmem:[#allocation2] sm:$0xff]
    %v24 = vld [vmem:[#allocation2 + $0x8] sm:$0xff]
    %v25 = vld [vmem:[%s0] sm:$0xf]
    %v26 = vld [vmem:[%s0 + $0x4] sm:$0xf]
    %v27 = vld [vmem:[%s1] sm:$0xf]
    %v28 = vld [vmem:[%s1 + $0x4] sm:$0xf]
    %v29 = vld [vmem:[%s1 + $0x8] sm:$0xf]
    %v30 = vld [vmem:[%s1 + $0xc] sm:$0xf]
    %v31 = vld [vmem:[%s1 + $0x10] sm:$0xf]
    %v32 = vld [vmem:[%s1 + $0x14] sm:$0xf]
    %v33 = vld [vmem:[%s1 + $0x18] sm:$0xf]
    %v34 = vld [vmem:[%s1 + $0x1c] sm:$0xf]
    %v37 = vunpack.c.l.b16 %v25
    %v38 = vunpack.c.l.b16 %v26
    %v39 = vpack.c.b16 %v38, %v37
    %v48 = vunpack.c.l.b16 %v27
    %v49 = vunpack.c.l.b16 %v28
    %v50 = vunpack.c.l.b16 %v29
    %v51 = vunpack.c.l.b16 %v30
    %v52 = vunpack.c.l.b16 %v31
    %v53 = vunpack.c.l.b16 %v32
    %v54 = vunpack.c.l.b16 %v33
    %v55 = vunpack.c.l.b16 %v34
    %v56 = vpack.c.b16 %v49, %v48
    %v57 = vpack.c.b16 %v51, %v50
    %v58 = vpack.c.b16 %v53, %v52
    %v59 = vpack.c.b16 %v55, %v54
    %vm64 = vcmask 523264
    %v66 = vsel %vm64, %v39, 0
    %68 = vmatprep.subr.bf16.mxu0 0
    %69 = vmatpush1.bf16.msra.mxu0 0
    %70 = vmatprep.subr.bf16.mxu0 0
    %71 = vmatpush1.bf16.msra.mxu0 0
    %72 = vmatprep.subr.bf16.mxu0 0
    %73 = vmatpush1.bf16.msra.mxu0 0
    %74 = vmatprep.subr.bf16.mxu0 0
    %75 = vmatpush1.bf16.msra.mxu0 0
    %76 = vmatprep.subr.bf16.mxu0 0
    %77 = vmatpush1.bf16.msra.mxu0 %v59
    %78 = vmatprep.subr.bf16.mxu0 0
    %79 = vmatpush1.bf16.msra.mxu0 %v58
    %80 = vmatprep.subr.bf16.mxu0 0
    %81 = vmatpush1.bf16.msra.mxu0 %v57
    %82 = vmatprep.subr.bf16.mxu0 0
    %83 = vmatpush1.bf16.msra.mxu0 %v56
    %84 = vmatprep.subr.bf16.mxu0 0
    %85 = vmatpush2.bf16.msra.mxu0 0
    %86 = vmatprep.subr.bf16.mxu0 0
    %87 = vmatpush2.bf16.msra.mxu0 0
    %88 = vmatprep.subr.bf16.mxu0 0
    %89 = vmatpush2.bf16.msra.mxu0 0
    %90 = vmatprep.subr.bf16.mxu0 0
    %91 = vmatpush2.bf16.msra.mxu0 0
    %92 = vmatprep.subr.bf16.mxu0 0
    %93 = vmatpush2.bf16.msra.mxu0 0
    %94 = vmatprep.subr.bf16.mxu0 0
    %95 = vmatpush2.bf16.msra.mxu0 0
    %96 = vmatprep.subr.bf16.mxu0 0
    %97 = vmatpush2.bf16.msra.mxu0 0
    %98 = vmatprep.subr.bf16.mxu0 0
    %99 = vmatpush2.bf16.msra.mxu0 0
    %100 = vmatprep.mubr.bf16.mxu0 0
    %101 = vmatmul.mubr.bf16.gmra.mxu0 %v66
    %v102 = vpop.f32.mrf.mxu0
    %v103 = vadd.f32 0.0, %v102
    %v104 = vpop.f32.mrf.mxu0
    %v105 = vpop.f32.mrf.mxu0
    %v106 = vadd.f32 0.0, %v105
    %v107 = vpop.f32.mrf.mxu0
    %108 = vdwg.mxu0
    %v109 = vadd.f32 %v23, %v103
    %v110 = vadd.f32 %v24, %v106
    %vm111 = vcmask 261120
    %112 = vst.msk [vmem:[#allocation2] sm:$0xff] %vm111, %v109
    %113 = vst.msk [vmem:[#allocation2 + $0x8] sm:$0xff] %vm111, %v110
    // Predicated region
    $region18: #{tpu_custom_call.1} parent=1 // pred_check
      %p114 = pneg %p16
    $region19: #{tpu_custom_call.1} parent=1 // pred_check_branch
      %116 = sbr.rel (%p114) target = $region21
    $region20: #{tpu_custom_call.1} parent=1 // pred_region
      %v117 = vld [vmem:[#allocation2] sm:$0xff]
      %v118 = vld [vmem:[#allocation2 + $0x8] sm:$0xff]
      %v119 = vld [vmem:[%s2] sm:$0x1]
      %v121 = vlaneseq
      %v122 = vshrl.u32 %v121, 7
      %v123 = vsub.s32 0, %v122
      %v124 = vrot.slane %v119, %v123
      %v126 = vadd.f32 %v117, %v124
      %v127 = vadd.f32 %v118, %v124
      %v128 = vpack.c.bf16 %v127, %v126
      %v130 = vunpack.c.l.b16 %v128
      %v131 = vunpack.c.h.b16 %v128
      %v132 = vpack.c.b16 %v130, %v130
      %v133 = vpack.c.b16 %v131, %v131
      %vm136 = vcmask 257024
      %137 = vst.msk [vmem:[#allocation3] sm:$0xf] %vm136, %v132
      %138 = vst.msk [vmem:[#allocation3 + $0x4] sm:$0xf] %vm136, %v133
    $region21: #{tpu_custom_call.1} parent=1 // pred_fallthru
      _
    // Predicated region
    $region22: #{tpu_custom_call.1} parent=1 // pred_check
      _
    $region23: #{tpu_custom_call.1} parent=1 // pred_check_branch
      %140 = sbr.rel (0) target = $region25
    $region24: #{tpu_custom_call.1} parent=1 // pred_region
      %s142 = ssub.s32 128, 128
      %143 = vsyncadd [#allocation4], %s142
      %s144 = sshll.u32 [#allocation3], 4
      %s145 = int_to_ptr.vmem [resolvable:$true] %s144
      %150 = dma.vmem_to_hbm [thread:$0]  %s145, 128, %s3, [#allocation4], 64, 64, 4
    $region25: #{tpu_custom_call.1} parent=1 // pred_fallthru
      _
    // Predicated region
    $region26: #{tpu_custom_call.1} parent=1 // pred_check
      _
    $region27: #{tpu_custom_call.1} parent=1 // pred_check_branch
      %152 = sbr.rel (0) target = $region29
    $region28: #{tpu_custom_call.1} parent=1 // pred_region
      %153 = dma.done [#allocation4], 128
    $region29: #{tpu_custom_call.1} parent=1 // pred_fallthru
      _
    %154 = vsyncpa [#allocation4], 1

// kernel: tpu_custom_call.1
$region0: #{tpu_custom_call.1}
  #allocation0 [shape = 'u32[]', space=smem, size = 0x4, offset = 0x4, fixed_abs, tag = 'smem constant byte address 0x4 - core index']
  #allocation1 [shape = 'u32[144,128]{1,0:T(1,128)}', space=vmem, size = 0x12000, scoped, tag = 'internal scratch']
  #allocation2 [shape = 'f32[16,32]{1,0:T(8,128)}', space=vmem, size = 0x2000, scoped, tag = 'scratch operand']
  %s0 = inlined_call_operand.vmem [shape: bf16[16,64], index: 0, kind: input, shape index: {}]
  %s1 = inlined_call_operand.vmem [shape: bf16[64,32], index: 1, kind: input, shape index: {}]
  %s2 = inlined_call_operand.vmem [shape: f32[1,32], index: 2, kind: input, shape index: {}]
  %s3 = inlined_call_operand.hbm [shape: bf16[16,32], index: 3, kind: output, shape index: {}]
  %s4 = sld [smem:[#allocation0]]
  $region30: #{tpu_custom_call.1} parent=0
    _
  %s6 = ssub.s32 1, %s4
  %s7 = scalar_select 0, %s6, %s4
  $region1: #{tpu_custom_call.1} parent=0
    #allocation3 [shape = 'u8[4096]{0}', space=vmem, size = 0x1000, scoped, tag = 'output window, operand 0, single buffered']
    #allocation4 [shape = 's32[1]{0}', space=sflag, size = 0x4, scoped, tag = 'scoped memory for tpu_custom_call.1']
    %8 = vsyncpa [#allocation4], 0
    // Predicated region
    $region2: #{tpu_custom_call.1} parent=1 // pred_check
      _
    $region3: #{tpu_custom_call.1} parent=1 // pred_check_branch
      %10 = sbr.rel (0) target = $region5
    $region4: #{tpu_custom_call.1} parent=1 // pred_region
      _
    $region5: #{tpu_custom_call.1} parent=1 // pred_fallthru
      _
    // Predicated region
    $region6: #{tpu_custom_call.1} parent=1 // pred_check
      _
    $region7: #{tpu_custom_call.1} parent=1 // pred_check_branch
      %12 = sbr.rel (0) target = $region9
    $region8: #{tpu_custom_call.1} parent=1 // pred_region
      _
    $region9: #{tpu_custom_call.1} parent=1 // pred_fallthru
      _
    // Predicated region
    $region10: #{tpu_custom_call.1} parent=1 // pred_check
      _
    $region11: #{tpu_custom_call.1} parent=1 // pred_check_branch
      %14 = sbr.rel (0) target = $region13
    $region12: #{tpu_custom_call.1} parent=1 // pred_region
      _
    $region13: #{tpu_custom_call.1} parent=1 // pred_fallthru
      _
    %p16 = scmp.eq.s32.totalorder 0, 0
    // Predicated region
    $region14: #{tpu_custom_call.1} parent=1 // pred_check
      %p17 = pneg %p16
    $region15: #{tpu_custom_call.1} parent=1 // pred_check_branch
      %19 = sbr.rel (%p17) target = $region17
    $region16: #{tpu_custom_call.1} parent=1 // pred_region
      %vm20 = vcmask 261120
      %21 = vst.msk [vmem:[#allocation2] sm:$0xff] %vm20, 0.0
      %22 = vst.msk [vmem:[#allocation2 + $0x8] sm:$0xff] %vm20, 0.0
    $region17: #{tpu_custom_call.1} parent=1 // pred_fallthru
      _
    %v23 = vld [vmem:[#allocation2] sm:$0xff]
    %v24 = vld [vmem:[#allocation2 + $0x8] sm:$0xff]
    %v25 = vld [vmem:[%s0] sm:$0xf]
    %v26 = vld [vmem:[%s0 + $0x4] sm:$0xf]
    %v27 = vld [vmem:[%s1] sm:$0xf]
    %v28 = vld [vmem:[%s1 + $0x4] sm:$0xf]
    %v29 = vld [vmem:[%s1 + $0x8] sm:$0xf]
    %v30 = vld [vmem:[%s1 + $0xc] sm:$0xf]
    %v31 = vld [vmem:[%s1 + $0x10] sm:$0xf]
    %v32 = vld [vmem:[%s1 + $0x14] sm:$0xf]
    %v33 = vld [vmem:[%s1 + $0x18] sm:$0xf]
    %v34 = vld [vmem:[%s1 + $0x1c] sm:$0xf]
    %v37 = vunpack.c.l.b16 %v25
    %v38 = vunpack.c.l.b16 %v26
    %v39 = vpack.c.b16 %v38, %v37
    %v48 = vunpack.c.l.b16 %v27
    %v49 = vunpack.c.l.b16 %v28
    %v50 = vunpack.c.l.b16 %v29
    %v51 = vunpack.c.l.b16 %v30
    %v52 = vunpack.c.l.b16 %v31
    %v53 = vunpack.c.l.b16 %v32
    %v54 = vunpack.c.l.b16 %v33
    %v55 = vunpack.c.l.b16 %v34
    %v56 = vpack.c.b16 %v49, %v48
    %v57 = vpack.c.b16 %v51, %v50
    %v58 = vpack.c.b16 %v53, %v52
    %v59 = vpack.c.b16 %v55, %v54
    %vm64 = vcmask 523264
    %v66 = vsel %vm64, %v39, 0
    %68 = vmatprep.subr.bf16.mxu0 0
    %69 = vmatpush1.bf16.msra.mxu0 0
    %70 = vmatprep.subr.bf16.mxu0 0
    %71 = vmatpush1.bf16.msra.mxu0 0
    %72 = vmatprep.subr.bf16.mxu0 0
    %73 = vmatpush1.bf16.msra.mxu0 0
    %74 = vmatprep.subr.bf16.mxu0 0
    %75 = vmatpush1.bf16.msra.mxu0 0
    %76 = vmatprep.subr.bf16.mxu0 0
    %77 = vmatpush1.bf16.msra.mxu0 %v59
    %78 = vmatprep.subr.bf16.mxu0 0
    %79 = vmatpush1.bf16.msra.mxu0 %v58
    %80 = vmatprep.subr.bf16.mxu0 0
    %81 = vmatpush1.bf16.msra.mxu0 %v57
    %82 = vmatprep.subr.bf16.mxu0 0
    %83 = vmatpush1.bf16.msra.mxu0 %v56
    %84 = vmatprep.subr.bf16.mxu0 0
    %85 = vmatpush2.bf16.msra.mxu0 0
    %86 = vmatprep.subr.bf16.mxu0 0
    %87 = vmatpush2.bf16.msra.mxu0 0
    %88 = vmatprep.subr.bf16.mxu0 0
    %89 = vmatpush2.bf16.msra.mxu0 0
    %90 = vmatprep.subr.bf16.mxu0 0
    %91 = vmatpush2.bf16.msra.mxu0 0
    %92 = vmatprep.subr.bf16.mxu0 0
    %93 = vmatpush2.bf16.msra.mxu0 0
    %94 = vmatprep.subr.bf16.mxu0 0
    %95 = vmatpush2.bf16.msra.mxu0 0
    %96 = vmatprep.subr.bf16.mxu0 0
    %97 = vmatpush2.bf16.msra.mxu0 0
    %98 = vmatprep.subr.bf16.mxu0 0
    %99 = vmatpush2.bf16.msra.mxu0 0
    %100 = vmatprep.mubr.bf16.mxu0 0
    %101 = vmatmul.mubr.bf16.gmra.mxu0 %v66
    %v102 = vpop.f32.mrf.mxu0
    %v103 = vadd.f32 0.0, %v102
    %v104 = vpop.f32.mrf.mxu0
    %v105 = vpop.f32.mrf.mxu0
    %v106 = vadd.f32 0.0, %v105
    %v107 = vpop.f32.mrf.mxu0
    %108 = vdwg.mxu0
    %v109 = vadd.f32 %v23, %v103
    %v110 = vadd.f32 %v24, %v106
    %vm111 = vcmask 261120
    %112 = vst.msk [vmem:[#allocation2] sm:$0xff] %vm111, %v109
    %113 = vst.msk [vmem:[#allocation2 + $0x8] sm:$0xff] %vm111, %v110
    // Predicated region
    $region18: #{tpu_custom_call.1} parent=1 // pred_check
      %p114 = pneg %p16
    $region19: #{tpu_custom_call.1} parent=1 // pred_check_branch
      %116 = sbr.rel (%p114) target = $region21
    $region20: #{tpu_custom_call.1} parent=1 // pred_region
      %v117 = vld [vmem:[#allocation2] sm:$0xff]
      %v118 = vld [vmem:[#allocation2 + $0x8] sm:$0xff]
      %v119 = vld [vmem:[%s2] sm:$0x1]
      %v121 = vlaneseq
      %v122 = vshrl.u32 %v121, 7
      %v123 = vsub.s32 0, %v122
      %v124 = vrot.slane %v119, %v123
      %v126 = vadd.f32 %v117, %v124
      %v127 = vadd.f32 %v118, %v124
      %v128 = vpack.c.bf16 %v127, %v126
      %v130 = vunpack.c.l.b16 %v128
      %v131 = vunpack.c.h.b16 %v128
      %v132 = vpack.c.b16 %v130, %v130
      %v133 = vpack.c.b16 %v131, %v131
      %vm136 = vcmask 257024
      %137 = vst.msk [vmem:[#allocation3] sm:$0xf] %vm136, %v132
      %138 = vst.msk [vmem:[#allocation3 + $0x4] sm:$0xf] %vm136, %v133
    $region21: #{tpu_custom_call.1} parent=1 // pred_fallthru
      _
    // Predicated region
    $region22: #{tpu_custom_call.1} parent=1 // pred_check
      _
    $region23: #{tpu_custom_call.1} parent=1 // pred_check_branch
      %140 = sbr.rel (0) target = $region25
    $region24: #{tpu_custom_call.1} parent=1 // pred_region
      %s142 = ssub.s32 128, 128
      %143 = vsyncadd [#allocation4], %s142
      %s144 = sshll.u32 [#allocation3], 4
      %s145 = int_to_ptr.vmem [resolvable:$true] %s144
      %150 = dma.vmem_to_hbm [thread:$0]  %s145, 128, %s3, [#allocation4], 64, 64, 4
    $region25: #{tpu_custom_call.1} parent=1 // pred_fallthru
      _
    // Predicated region
    $region26: #{tpu_custom_call.1} parent=1 // pred_check
      _
    $region27: #{tpu_custom_call.1} parent=1 // pred_check_branch
      %152 = sbr.rel (0) target = $region29
    $region28: #{tpu_custom_call.1} parent=1 // pred_region
      %153 = dma.done [#allocation4], 128
    $region29: #{tpu_custom_call.1} parent=1 // pred_fallthru
      _
    %154 = vsyncpa [#allocation4], 1

</llo_original>
